<compile_context>
chip_gen: v7x
topology: tpu7x:2x2x1
jax: 0.10.0
libtpu: 0.0.40
codegen_flags: <defaults>
</compile_context>

<pallas_src>
import jax
import jax.numpy as jnp
from jax.experimental import pallas as pl
from jax.experimental.pallas import tpu as pltpu


HIDDEN = 128
DEFAULT_TILE_B = 2048  # batch columns per grid step (multiple of 128, VMEM-tiny)


def actor_kernel(x_ref, w1_ref, b1_ref, w2_ref, b2_ref, out_ref):
    """One batch tile of the fused forward pass (feature-major layout).

    x_ref  : (in_dim, TB)        -- batch on the 128-lane axis
    w1_ref : (HIDDEN, in_dim)     b1_ref: (HIDDEN, 1)
    w2_ref : (out_dim, HIDDEN)    b2_ref: (out_dim, 1)
    out_ref: (out_dim, TB)       -- softmax probabilities per column
    """
    x = x_ref[...]

    # fc1 + ReLU  (MXU matmul, f32 accumulation)
    h = jnp.dot(w1_ref[...], x, preferred_element_type=jnp.float32) + b1_ref[...]
    h = jnp.maximum(h, 0.0)

    # fc2
    logits = jnp.dot(w2_ref[...], h, preferred_element_type=jnp.float32) + b2_ref[...]

    # Numerically-stable softmax over the feature axis (axis 0, only out_dim
    # sublanes).  Exact divide: the kernel is memory/step-overhead bound, so an
    # approximate reciprocal saves nothing and costs accuracy.
    m = jnp.max(logits, axis=0, keepdims=True)
    e = jnp.exp(logits - m)
    denom = jnp.sum(e, axis=0, keepdims=True)
    out_ref[...] = (e / denom).astype(out_ref.dtype)


def _choose_tile(batch, tile_b):
    """Pick a lane-dense batch tile: full batch when small, otherwise a
    128-aligned tile capped at ~B/2 so v7x's two TensorCores both get work."""
    if batch <= 512:
        return batch
    half = -(-batch // 2)                 # cdiv(B, 2)
    half_rounded = ((half + 127) // 128) * 128
    return min(tile_b, half_rounded)


def actor_forward(state, w1, b1, w2, b2, *, tile_b=DEFAULT_TILE_B):
    """state: (B, in_dim) batch-major (PyTorch convention).
    w1: (HIDDEN, in_dim), b1: (HIDDEN, 1), w2: (out_dim, HIDDEN), b2: (out_dim, 1)
    Returns (B, out_dim) action probabilities."""
    B, in_dim = state.shape
    out_dim = w2.shape[0]

    # Wrapper-side transpose = cheap layout plumbing; puts batch on the lanes.
    x_t = state.T  # (in_dim, B)

    tb = _choose_tile(B, tile_b)
    grid = (pl.cdiv(B, tb),)

    out_t = pl.pallas_call(
        actor_kernel,
        out_shape=jax.ShapeDtypeStruct((out_dim, B), jnp.float32),
        grid=grid,
        in_specs=[
            # x: marches along the batch (lane) axis.
            pl.BlockSpec((in_dim, tb), lambda i: (0, i)),
            # Weights / biases: same block every step -> DMA once, VMEM-resident.
            pl.BlockSpec((HIDDEN, in_dim), lambda i: (0, 0)),
            pl.BlockSpec((HIDDEN, 1), lambda i: (0, 0)),
            pl.BlockSpec((out_dim, HIDDEN), lambda i: (0, 0)),
            pl.BlockSpec((out_dim, 1), lambda i: (0, 0)),
        ],
        out_specs=pl.BlockSpec((out_dim, tb), lambda i: (0, i)),
        compiler_params=pltpu.CompilerParams(
            # Batch tiles are independent -> shard across TCs on v7x megacore.
            dimension_semantics=("parallel",),
        ),
    )(x_t, w1, b1, w2, b2)

    return out_t.T  # back to (B, out_dim)


def init_actor_params(key, in_dim, out_dim):
    """Deterministic init mimicking PyTorch nn.Linear (uniform +/- 1/sqrt(fan_in)).
    Weights stored in PyTorch layout (out_features, in_features); biases as columns."""
    k1, k2, k3, k4 = jax.random.split(key, 4)
    bound1 = 1.0 / jnp.sqrt(jnp.float32(in_dim))
    bound2 = 1.0 / jnp.sqrt(jnp.float32(HIDDEN))
    w1 = jax.random.uniform(k1, (HIDDEN, in_dim), jnp.float32, -bound1, bound1)
    b1 = jax.random.uniform(k2, (HIDDEN, 1), jnp.float32, -bound1, bound1)
    w2 = jax.random.uniform(k3, (out_dim, HIDDEN), jnp.float32, -bound2, bound2)
    b2 = jax.random.uniform(k4, (out_dim, 1), jnp.float32, -bound2, bound2)
    return w1, b1, w2, b2


def _reference(state, w1, b1, w2, b2):
    h = jnp.maximum(state @ w1.T + b1.reshape(1, -1), 0.0)
    logits = h @ w2.T + b2.reshape(1, -1)
    return jax.nn.softmax(logits, axis=-1)


if __name__ == "__main__":
    key = jax.random.PRNGKey(0)
    k_params, k_state_small, k_state_big = jax.random.split(key, 3)

    # Small shapes consistent with a typical RL env (e.g. CartPole: 4 -> 2).
    in_dim, out_dim = 4, 2
    w1, b1, w2, b2 = init_actor_params(k_params, in_dim, out_dim)

    # --- Case 1: tiny batch (single grid step, tile == full batch) ---------
    B_small = 2
    state_small = jax.random.normal(k_state_small, (B_small, in_dim), jnp.float32)
    probs_small = jax.block_until_ready(actor_forward(state_small, w1, b1, w2, b2))
    ref_small = _reference(state_small, w1, b1, w2, b2)
    assert probs_small.shape == (B_small, out_dim)
    assert jnp.allclose(probs_small, ref_small, atol=1e-5), "small-batch mismatch"
    assert jnp.allclose(jnp.sum(probs_small, axis=-1), 1.0, atol=1e-5)

    # --- Case 2: vectorized-env batch (exercises the batch grid / pipeline) -
    B_big = 2048  # two grid steps of 1024 lane-dense columns
    state_big = jax.random.normal(k_state_big, (B_big, in_dim), jnp.float32)
    probs_big = jax.block_until_ready(actor_forward(state_big, w1, b1, w2, b2))
    ref_big = _reference(state_big, w1, b1, w2, b2)
    assert probs_big.shape == (B_big, out_dim)
    assert jnp.allclose(probs_big, ref_big, atol=1e-5), "big-batch mismatch"
    assert jnp.allclose(jnp.sum(probs_big, axis=-1), 1.0, atol=1e-5)

    print("KERNEL_OK")
</pallas_src>

<mosaic_0001>
module attributes {stable_mosaic.version = 11 : i64} {
  func.func @actor_kernel(%arg0: i32, %arg1: memref<4x2xf32, #tpu.memory_space<vmem>>, %arg2: memref<128x4xf32, #tpu.memory_space<vmem>>, %arg3: memref<128x1xf32, #tpu.memory_space<vmem>>, %arg4: memref<2x128xf32, #tpu.memory_space<vmem>>, %arg5: memref<2x1xf32, #tpu.memory_space<vmem>>, %arg6: memref<2x2xf32, #tpu.memory_space<vmem>>) attributes {dimension_semantics = [#tpu.dimension_semantics<parallel>], iteration_bounds = array<i64: 1>, scalar_prefetch = 0 : i64, scratch_operands = 0 : i64, tpu.core_type = #tpu.core_type<tc>, window_params = [{transform_indices = @transform_0, window_bounds = array<i64: 4, 2>}, {pipeline_mode = #tpu.pipeline_mode<synchronous>, transform_indices = @transform_1, window_bounds = array<i64: 128, 4>}, {pipeline_mode = #tpu.pipeline_mode<synchronous>, transform_indices = @transform_2, window_bounds = array<i64: 128, 1>}, {pipeline_mode = #tpu.pipeline_mode<synchronous>, transform_indices = @transform_3, window_bounds = array<i64: 2, 128>}, {pipeline_mode = #tpu.pipeline_mode<synchronous>, transform_indices = @transform_4, window_bounds = array<i64: 2, 1>}, {transform_indices = @transform_5, window_bounds = array<i64: 2, 2>}]} {
    %c0 = arith.constant 0 : index
    %c0_0 = arith.constant 0 : index
    %0 = vector.load %arg1[%c0, %c0_0] : memref<4x2xf32, #tpu.memory_space<vmem>>, vector<4x2xf32>
    %c0_1 = arith.constant 0 : index
    %c0_2 = arith.constant 0 : index
    %1 = vector.load %arg2[%c0_1, %c0_2] : memref<128x4xf32, #tpu.memory_space<vmem>>, vector<128x4xf32>
    %cst = arith.constant dense<0.000000e+00> : vector<128x2xf32>
    %2 = tpu.matmul %1, %0, %cst {dimension_numbers = #tpu.dot_dimension_numbers<[1], [0], [0], [1], [0, 0, 1, 1], [], []>} : vector<128x4xf32>, vector<4x2xf32>, vector<128x2xf32> -> vector<128x2xf32>
    %c0_3 = arith.constant 0 : index
    %c0_4 = arith.constant 0 : index
    %3 = vector.load %arg3[%c0_3, %c0_4] : memref<128x1xf32, #tpu.memory_space<vmem>>, vector<128x1xf32>
    %4 = vector.broadcast %3 : vector<128x1xf32> to vector<128x2xf32>
    %5 = arith.addf %2, %4 : vector<128x2xf32>
    %cst_5 = arith.constant 0.000000e+00 : f32
    %6 = vector.broadcast %cst_5 : f32 to vector<128x2xf32>
    %7 = arith.maximumf %5, %6 : vector<128x2xf32>
    %c0_6 = arith.constant 0 : index
    %c0_7 = arith.constant 0 : index
    %8 = vector.load %arg4[%c0_6, %c0_7] : memref<2x128xf32, #tpu.memory_space<vmem>>, vector<2x128xf32>
    %cst_8 = arith.constant dense<0.000000e+00> : vector<2x2xf32>
    %9 = tpu.matmul %8, %7, %cst_8 {dimension_numbers = #tpu.dot_dimension_numbers<[1], [0], [0], [1], [0, 0, 1, 1], [], []>} : vector<2x128xf32>, vector<128x2xf32>, vector<2x2xf32> -> vector<2x2xf32>
    %c0_9 = arith.constant 0 : index
    %c0_10 = arith.constant 0 : index
    %10 = vector.load %arg5[%c0_9, %c0_10] : memref<2x1xf32, #tpu.memory_space<vmem>>, vector<2x1xf32>
    %11 = vector.broadcast %10 : vector<2x1xf32> to vector<2x2xf32>
    %12 = arith.addf %9, %11 : vector<2x2xf32>
    %cst_11 = arith.constant dense<0xFF800000> : vector<2xf32>
    %13 = vector.multi_reduction <maximumf>, %12, %cst_11 [0] : vector<2x2xf32> to vector<2xf32>
    %14 = vector.shape_cast %13 : vector<2xf32> to vector<1x2xf32>
    %15 = vector.broadcast %14 : vector<1x2xf32> to vector<2x2xf32>
    %16 = arith.subf %12, %15 : vector<2x2xf32>
    %17 = math.exp %16 : vector<2x2xf32>
    %cst_12 = arith.constant dense<0.000000e+00> : vector<2xf32>
    %18 = vector.multi_reduction <add>, %17, %cst_12 [0] : vector<2x2xf32> to vector<2xf32>
    %19 = vector.shape_cast %18 : vector<2xf32> to vector<1x2xf32>
    %20 = vector.broadcast %19 : vector<1x2xf32> to vector<2x2xf32>
    %21 = arith.divf %17, %20 : vector<2x2xf32>
    %c0_13 = arith.constant 0 : index
    %c0_14 = arith.constant 0 : index
    %22 = vector.load %arg6[%c0_13, %c0_14] : memref<2x2xf32, #tpu.memory_space<vmem>>, vector<2x2xf32>
    tpu.vector_store %arg6[%c0_13, %c0_14], %21 {strides = array<i32>} : memref<2x2xf32, #tpu.memory_space<vmem>>, vector<2x2xf32>,
    return
  }
  func.func @transform_0(%arg0: i32) -> (i32, i32) {
    %c0_i32 = arith.constant 0 : i32
    %c0_i32_0 = arith.constant 0 : i32
    return %c0_i32, %arg0 : i32, i32
  }
  func.func @transform_1(%arg0: i32) -> (i32, i32) {
    %c0_i32 = arith.constant 0 : i32
    %c0_i32_0 = arith.constant 0 : i32
    %c0_i32_1 = arith.constant 0 : i32
    return %c0_i32, %c0_i32_0 : i32, i32
  }
  func.func @transform_2(%arg0: i32) -> (i32, i32) {
    %c0_i32 = arith.constant 0 : i32
    %c0_i32_0 = arith.constant 0 : i32
    %c0_i32_1 = arith.constant 0 : i32
    return %c0_i32, %c0_i32_0 : i32, i32
  }
  func.func @transform_3(%arg0: i32) -> (i32, i32) {
    %c0_i32 = arith.constant 0 : i32
    %c0_i32_0 = arith.constant 0 : i32
    %c0_i32_1 = arith.constant 0 : i32
    return %c0_i32, %c0_i32_0 : i32, i32
  }
  func.func @transform_4(%arg0: i32) -> (i32, i32) {
    %c0_i32 = arith.constant 0 : i32
    %c0_i32_0 = arith.constant 0 : i32
    %c0_i32_1 = arith.constant 0 : i32
    return %c0_i32, %c0_i32_0 : i32, i32
  }
  func.func @transform_5(%arg0: i32) -> (i32, i32) {
    %c0_i32 = arith.constant 0 : i32
    %c0_i32_0 = arith.constant 0 : i32
    return %c0_i32, %arg0 : i32, i32
  }
}

</mosaic_0001>

<llo_original>
// kernel: tpu_custom_call.1
$region0: #{tpu_custom_call.1}
  #allocation0 [shape = 'u32[]', space=smem, size = 0x4, offset = 0x4, fixed_abs, tag = 'smem constant byte address 0x4 - core index']
  #allocation1 [shape = 'u32[144,128]{1,0:T(1,128)}', space=vmem, size = 0x12000, scoped, tag = 'internal scratch']
  %s0 = inlined_call_operand.vmem [shape: f32[4,2], index: 0, kind: input, shape index: {}]
  %s1 = inlined_call_operand.vmem [shape: f32[128,4], index: 1, kind: input, shape index: {}]
  %s2 = inlined_call_operand.vmem [shape: f32[128,1], index: 2, kind: input, shape index: {}]
  %s3 = inlined_call_operand.vmem [shape: f32[2,128], index: 3, kind: input, shape index: {}]
  %s4 = inlined_call_operand.vmem [shape: f32[2,1], index: 4, kind: input, shape index: {}]
  %s5 = inlined_call_operand.hbm [shape: f32[2,2], index: 5, kind: output, shape index: {}]
  %s6 = sld [smem:[#allocation0]]
  $region30: #{tpu_custom_call.1} parent=0
    _
  %s8 = ssub.s32 1, %s6
  %s9 = scalar_select 0, %s8, %s6
  $region1: #{tpu_custom_call.1} parent=0
    #allocation2 [shape = 'u8[1024]{0}', space=vmem, size = 0x400, scoped, tag = 'output window, operand 0, single buffered']
    #allocation3 [shape = 's32[1]{0}', space=sflag, size = 0x4, scoped, tag = 'scoped memory for tpu_custom_call.1']
    %10 = vsyncpa [#allocation3], 0
    // Predicated region
    $region2: #{tpu_custom_call.1} parent=1 // pred_check
      _
    $region3: #{tpu_custom_call.1} parent=1 // pred_check_branch
      %12 = sbr.rel (0) target = $region5
    $region4: #{tpu_custom_call.1} parent=1 // pred_region
      _
    $region5: #{tpu_custom_call.1} parent=1 // pred_fallthru
      _
    // Predicated region
    $region6: #{tpu_custom_call.1} parent=1 // pred_check
      _
    $region7: #{tpu_custom_call.1} parent=1 // pred_check_branch
      %14 = sbr.rel (0) target = $region9
    $region8: #{tpu_custom_call.1} parent=1 // pred_region
      _
    $region9: #{tpu_custom_call.1} parent=1 // pred_fallthru
      _
    // Predicated region
    $region10: #{tpu_custom_call.1} parent=1 // pred_check
      _
    $region11: #{tpu_custom_call.1} parent=1 // pred_check_branch
      %16 = sbr.rel (0) target = $region13
    $region12: #{tpu_custom_call.1} parent=1 // pred_region
      _
    $region13: #{tpu_custom_call.1} parent=1 // pred_fallthru
      _
    // Predicated region
    $region14: #{tpu_custom_call.1} parent=1 // pred_check
      _
    $region15: #{tpu_custom_call.1} parent=1 // pred_check_branch
      %18 = sbr.rel (0) target = $region17
    $region16: #{tpu_custom_call.1} parent=1 // pred_region
      _
    $region17: #{tpu_custom_call.1} parent=1 // pred_fallthru
      _
    // Predicated region
    $region18: #{tpu_custom_call.1} parent=1 // pred_check
      _
    $region19: #{tpu_custom_call.1} parent=1 // pred_check_branch
      %20 = sbr.rel (0) target = $region21
    $region20: #{tpu_custom_call.1} parent=1 // pred_region
      _
    $region21: #{tpu_custom_call.1} parent=1 // pred_fallthru
      _
    %v21 = vld [vmem:[%s0] sm:$0xf]
    %v22 = vld [vmem:[%s1] sm:$0xff]
    %v23 = vld [vmem:[%s1 + $0x8] sm:$0xff]
    %v24 = vld [vmem:[%s1 + $0x10] sm:$0xff]
    %v25 = vld [vmem:[%s1 + $0x18] sm:$0xff]
    %v26 = vld [vmem:[%s1 + $0x20] sm:$0xff]
    %v27 = vld [vmem:[%s1 + $0x28] sm:$0xff]
    %v28 = vld [vmem:[%s1 + $0x30] sm:$0xff]
    %v29 = vld [vmem:[%s1 + $0x38] sm:$0xff]
    %v30 = vld [vmem:[%s1 + $0x40] sm:$0xff]
    %v31 = vld [vmem:[%s1 + $0x48] sm:$0xff]
    %v32 = vld [vmem:[%s1 + $0x50] sm:$0xff]
    %v33 = vld [vmem:[%s1 + $0x58] sm:$0xff]
    %v34 = vld [vmem:[%s1 + $0x60] sm:$0xff]
    %v35 = vld [vmem:[%s1 + $0x68] sm:$0xff]
    %v36 = vld [vmem:[%s1 + $0x70] sm:$0xff]
    %v37 = vld [vmem:[%s1 + $0x78] sm:$0xff]
    %v38 = vld [vmem:[%s2] sm:$0xff]
    %v39 = vld [vmem:[%s2 + $0x8] sm:$0xff]
    %v40 = vld [vmem:[%s2 + $0x10] sm:$0xff]
    %v41 = vld [vmem:[%s2 + $0x18] sm:$0xff]
    %v42 = vld [vmem:[%s2 + $0x20] sm:$0xff]
    %v43 = vld [vmem:[%s2 + $0x28] sm:$0xff]
    %v44 = vld [vmem:[%s2 + $0x30] sm:$0xff]
    %v45 = vld [vmem:[%s2 + $0x38] sm:$0xff]
    %v46 = vld [vmem:[%s2 + $0x40] sm:$0xff]
    %v47 = vld [vmem:[%s2 + $0x48] sm:$0xff]
    %v48 = vld [vmem:[%s2 + $0x50] sm:$0xff]
    %v49 = vld [vmem:[%s2 + $0x58] sm:$0xff]
    %v50 = vld [vmem:[%s2 + $0x60] sm:$0xff]
    %v51 = vld [vmem:[%s2 + $0x68] sm:$0xff]
    %v52 = vld [vmem:[%s2 + $0x70] sm:$0xff]
    %v53 = vld [vmem:[%s2 + $0x78] sm:$0xff]
    %55 = vset.pattern.permute.xlu0 0
    %56 = vperm.xlu0 %55, %v38
    %v57 = vpop.permute.xlu0 %56
    %60 = vset.pattern.permute.xlu0 0
    %61 = vperm.xlu0 %60, %v39
    %v62 = vpop.permute.xlu0 %61
    %65 = vset.pattern.permute.xlu0 0
    %66 = vperm.xlu0 %65, %v40
    %v67 = vpop.permute.xlu0 %66
    %70 = vset.pattern.permute.xlu0 0
    %71 = vperm.xlu0 %70, %v41
    %v72 = vpop.permute.xlu0 %71
    %75 = vset.pattern.permute.xlu0 0
    %76 = vperm.xlu0 %75, %v42
    %v77 = vpop.permute.xlu0 %76
    %80 = vset.pattern.permute.xlu0 0
    %81 = vperm.xlu0 %80, %v43
    %v82 = vpop.permute.xlu0 %81
    %85 = vset.pattern.permute.xlu0 0
    %86 = vperm.xlu0 %85, %v44
    %v87 = vpop.permute.xlu0 %86
    %90 = vset.pattern.permute.xlu0 0
    %91 = vperm.xlu0 %90, %v45
    %v92 = vpop.permute.xlu0 %91
    %95 = vset.pattern.permute.xlu0 0
    %96 = vperm.xlu0 %95, %v46
    %v97 = vpop.permute.xlu0 %96
    %100 = vset.pattern.permute.xlu0 0
    %101 = vperm.xlu0 %100, %v47
    %v102 = vpop.permute.xlu0 %101
    %105 = vset.pattern.permute.xlu0 0
    %106 = vperm.xlu0 %105, %v48
    %v107 = vpop.permute.xlu0 %106
    %110 = vset.pattern.permute.xlu0 0
    %111 = vperm.xlu0 %110, %v49
    %v112 = vpop.permute.xlu0 %111
    %115 = vset.pattern.permute.xlu0 0
    %116 = vperm.xlu0 %115, %v50
    %v117 = vpop.permute.xlu0 %116
    %120 = vset.pattern.permute.xlu0 0
    %121 = vperm.xlu0 %120, %v51
    %v122 = vpop.permute.xlu0 %121
    %125 = vset.pattern.permute.xlu0 0
    %126 = vperm.xlu0 %125, %v52
    %v127 = vpop.permute.xlu0 %126
    %130 = vset.pattern.permute.xlu0 0
    %131 = vperm.xlu0 %130, %v53
    %v132 = vpop.permute.xlu0 %131
    %vm134 = vcmask 31744
    %v136 = vsel %vm134, %v22, 0
    %v139 = vsel %vm134, %v23, 0
    %v142 = vsel %vm134, %v24, 0
    %v145 = vsel %vm134, %v25, 0
    %v148 = vsel %vm134, %v26, 0
    %v151 = vsel %vm134, %v27, 0
    %v154 = vsel %vm134, %v28, 0
    %v157 = vsel %vm134, %v29, 0
    %v160 = vsel %vm134, %v30, 0
    %v163 = vsel %vm134, %v31, 0
    %v166 = vsel %vm134, %v32, 0
    %v169 = vsel %vm134, %v33, 0
    %v172 = vsel %vm134, %v34, 0
    %v175 = vsel %vm134, %v35, 0
    %v178 = vsel %vm134, %v36, 0
    %v181 = vsel %vm134, %v37, 0
    %vm183 = vcmask 1043456
    %v185 = vsel %vm183, %v21, 0
    %187 = vmatprep.subr.mxu0 0.0
    %188 = vmatpush1.msra.mxu0 %v185
    %189 = vmatprep.subr.mxu0 0.0
    %190 = vmatpush1.msra.mxu0 0.0
    %191 = vmatprep.subr.mxu0 0.0
    %192 = vmatpush1.msra.mxu0 0.0
    %193 = vmatprep.subr.mxu0 0.0
    %194 = vmatpush1.msra.mxu0 0.0
    %195 = vmatprep.subr.mxu0 0.0
    %196 = vmatpush1.msra.mxu0 0.0
    %197 = vmatprep.subr.mxu0 0.0
    %198 = vmatpush1.msra.mxu0 0.0
    %199 = vmatprep.subr.mxu0 0.0
    %200 = vmatpush1.msra.mxu0 0.0
    %201 = vmatprep.subr.mxu0 0.0
    %202 = vmatpush1.msra.mxu0 0.0
    %203 = vmatprep.subr.mxu0 0.0
    %204 = vmatpush1.msra.mxu0 0.0
    %205 = vmatprep.subr.mxu0 0.0
    %206 = vmatpush1.msra.mxu0 0.0
    %207 = vmatprep.subr.mxu0 0.0
    %208 = vmatpush1.msra.mxu0 0.0
    %209 = vmatprep.subr.mxu0 0.0
    %210 = vmatpush1.msra.mxu0 0.0
    %211 = vmatprep.subr.mxu0 0.0
    %212 = vmatpush1.msra.mxu0 0.0
    %213 = vmatprep.subr.mxu0 0.0
    %214 = vmatpush1.msra.mxu0 0.0
    %215 = vmatprep.subr.mxu0 0.0
    %216 = vmatpush1.msra.mxu0 0.0
    %217 = vmatprep.subr.mxu0 0.0
    %218 = vmatpush1.msra.mxu0 0.0
    %219 = vmatprep.subr.mxu0 0.0
    %220 = vmatpush1.msra.mxu0 0.0
    %221 = vmatprep.subr.mxu0 0.0
    %222 = vmatpush1.msra.mxu0 0.0
    %223 = vmatprep.subr.mxu0 0.0
    %224 = vmatpush1.msra.mxu0 0.0
    %225 = vmatprep.subr.mxu0 0.0
    %226 = vmatpush1.msra.mxu0 0.0
    %227 = vmatprep.subr.mxu0 0.0
    %228 = vmatpush1.msra.mxu0 0.0
    %229 = vmatprep.subr.mxu0 0.0
    %230 = vmatpush1.msra.mxu0 0.0
    %231 = vmatprep.subr.mxu0 0.0
    %232 = vmatpush1.msra.mxu0 0.0
    %233 = vmatprep.subr.mxu0 0.0
    %234 = vmatpush1.msra.mxu0 0.0
    %235 = vmatprep.subr.mxu0 0.0
    %236 = vmatpush1.msra.mxu0 0.0
    %237 = vmatprep.subr.mxu0 0.0
    %238 = vmatpush1.msra.mxu0 0.0
    %239 = vmatprep.subr.mxu0 0.0
    %240 = vmatpush1.msra.mxu0 0.0
    %241 = vmatprep.subr.mxu0 0.0
    %242 = vmatpush1.msra.mxu0 0.0
    %243 = vmatprep.subr.mxu0 0.0
    %244 = vmatpush1.msra.mxu0 0.0
    %245 = vmatprep.subr.mxu0 0.0
    %246 = vmatpush1.msra.mxu0 0.0
    %247 = vmatprep.subr.mxu0 0.0
    %248 = vmatpush1.msra.mxu0 0.0
    %249 = vmatprep.subr.mxu0 0.0
    %250 = vmatpush1.msra.mxu0 0.0
    %251 = vmatprep.mubr.f32.mxu0 0.0
    %252 = vmatmul.mubr.f32.gmra.mrb[0].mxu0 %v136
    %v253 = vpop.f32.mrb[0].mxu0
    %v254 = vadd.f32 %v57, %v253
    %v255 = vpop.f32.mrb[0].mxu0
    %256 = vmatprep.mubr.f32.mxu0 0.0
    %257 = vmatmul.mubr.f32.gmra.mrb[0].mxu0 %v139
    %v258 = vpop.f32.mrb[0].mxu0
    %v259 = vadd.f32 %v62, %v258
    %v260 = vpop.f32.mrb[0].mxu0
    %261 = vmatprep.mubr.f32.mxu0 0.0
    %262 = vmatmul.mubr.f32.gmra.mrb[0].mxu0 %v142
    %v263 = vpop.f32.mrb[0].mxu0
    %v264 = vadd.f32 %v67, %v263
    %v265 = vpop.f32.mrb[0].mxu0
    %266 = vmatprep.mubr.f32.mxu0 0.0
    %267 = vmatmul.mubr.f32.gmra.mrb[0].mxu0 %v145
    %v268 = vpop.f32.mrb[0].mxu0
    %v269 = vadd.f32 %v72, %v268
    %v270 = vpop.f32.mrb[0].mxu0
    %271 = vmatprep.mubr.f32.mxu0 0.0
    %272 = vmatmul.mubr.f32.gmra.mrb[0].mxu0 %v148
    %v273 = vpop.f32.mrb[0].mxu0
    %v274 = vadd.f32 %v77, %v273
    %v275 = vpop.f32.mrb[0].mxu0
    %276 = vmatprep.mubr.f32.mxu0 0.0
    %277 = vmatmul.mubr.f32.gmra.mrb[0].mxu0 %v151
    %v278 = vpop.f32.mrb[0].mxu0
    %v279 = vadd.f32 %v82, %v278
    %v280 = vpop.f32.mrb[0].mxu0
    %281 = vmatprep.mubr.f32.mxu0 0.0
    %282 = vmatmul.mubr.f32.gmra.mrb[0].mxu0 %v154
    %v283 = vpop.f32.mrb[0].mxu0
    %v284 = vadd.f32 %v87, %v283
    %v285 = vpop.f32.mrb[0].mxu0
    %286 = vmatprep.mubr.f32.mxu0 0.0
    %287 = vmatmul.mubr.f32.gmra.mrb[0].mxu0 %v157
    %v288 = vpop.f32.mrb[0].mxu0
    %v289 = vadd.f32 %v92, %v288
    %v290 = vpop.f32.mrb[0].mxu0
    %291 = vmatprep.mubr.f32.mxu0 0.0
    %292 = vmatmul.mubr.f32.gmra.mrb[0].mxu0 %v160
    %v293 = vpop.f32.mrb[0].mxu0
    %v294 = vadd.f32 %v97, %v293
    %v295 = vpop.f32.mrb[0].mxu0
    %296 = vmatprep.mubr.f32.mxu0 0.0
    %297 = vmatmul.mubr.f32.gmra.mrb[0].mxu0 %v163
    %v298 = vpop.f32.mrb[0].mxu0
    %v299 = vadd.f32 %v102, %v298
    %v300 = vpop.f32.mrb[0].mxu0
    %301 = vmatprep.mubr.f32.mxu0 0.0
    %302 = vmatmul.mubr.f32.gmra.mrb[0].mxu0 %v166
    %v303 = vpop.f32.mrb[0].mxu0
    %v304 = vadd.f32 %v107, %v303
    %v305 = vpop.f32.mrb[0].mxu0
    %306 = vmatprep.mubr.f32.mxu0 0.0
    %307 = vmatmul.mubr.f32.gmra.mrb[0].mxu0 %v169
    %v308 = vpop.f32.mrb[0].mxu0
    %v309 = vadd.f32 %v112, %v308
    %v310 = vpop.f32.mrb[0].mxu0
    %311 = vmatprep.mubr.f32.mxu0 0.0
    %312 = vmatmul.mubr.f32.gmra.mrb[0].mxu0 %v172
    %v313 = vpop.f32.mrb[0].mxu0
    %v314 = vadd.f32 %v117, %v313
    %v315 = vpop.f32.mrb[0].mxu0
    %316 = vmatprep.mubr.f32.mxu0 0.0
    %317 = vmatmul.mubr.f32.gmra.mrb[0].mxu0 %v175
    %v318 = vpop.f32.mrb[0].mxu0
    %v319 = vadd.f32 %v122, %v318
    %v320 = vpop.f32.mrb[0].mxu0
    %321 = vmatprep.mubr.f32.mxu0 0.0
    %322 = vmatmul.mubr.f32.gmra.mrb[0].mxu0 %v178
    %v323 = vpop.f32.mrb[0].mxu0
    %v324 = vadd.f32 %v127, %v323
    %v325 = vpop.f32.mrb[0].mxu0
    %326 = vmatprep.mubr.f32.mxu0 0.0
    %327 = vmatmul.mubr.f32.gmra.mrb[0].mxu0 %v181
    %v328 = vpop.f32.mrb[0].mxu0
    %v329 = vadd.f32 %v132, %v328
    %v330 = vpop.f32.mrb[0].mxu0
    %331 = vdwg.mxu0
    %v332 = vmax.f32 %v254, 0.0
    %v333 = vmax.f32 %v259, 0.0
    %v334 = vmax.f32 %v264, 0.0
    %v335 = vmax.f32 %v269, 0.0
    %v336 = vmax.f32 %v274, 0.0
    %v337 = vmax.f32 %v279, 0.0
    %v338 = vmax.f32 %v284, 0.0
    %v339 = vmax.f32 %v289, 0.0
    %v340 = vmax.f32 %v294, 0.0
    %v341 = vmax.f32 %v299, 0.0
    %v342 = vmax.f32 %v304, 0.0
    %v343 = vmax.f32 %v309, 0.0
    %v344 = vmax.f32 %v314, 0.0
    %v345 = vmax.f32 %v319, 0.0
    %v346 = vmax.f32 %v324, 0.0
    %v347 = vmax.f32 %v329, 0.0
    %v348 = vld [vmem:[%s3] sm:$0x3]
    %v349 = vld [vmem:[%s4] sm:$0x3]
    %351 = vset.pattern.permute.xlu0 0
    %352 = vperm.xlu0 %351, %v349
    %v353 = vpop.permute.xlu0 %352
    %355 = vmatprep.subr.mxu0 0.0
    %356 = vmatpush1.msra.mxu0 %v332
    %357 = vmatprep.subr.mxu0 0.0
    %358 = vmatpush1.msra.mxu0 %v333
    %359 = vmatprep.subr.mxu0 0.0
    %360 = vmatpush1.msra.mxu0 %v334
    %361 = vmatprep.subr.mxu0 0.0
    %362 = vmatpush1.msra.mxu0 %v335
    %363 = vmatprep.subr.mxu0 0.0
    %364 = vmatpush1.msra.mxu0 %v336
    %365 = vmatprep.subr.mxu0 0.0
    %366 = vmatpush1.msra.mxu0 %v337
    %367 = vmatprep.subr.mxu0 0.0
    %368 = vmatpush1.msra.mxu0 %v338
    %369 = vmatprep.subr.mxu0 0.0
    %370 = vmatpush1.msra.mxu0 %v339
    %371 = vmatprep.subr.mxu0 0.0
    %372 = vmatpush1.msra.mxu0 %v340
    %373 = vmatprep.subr.mxu0 0.0
    %374 = vmatpush1.msra.mxu0 %v341
    %375 = vmatprep.subr.mxu0 0.0
    %376 = vmatpush1.msra.mxu0 %v342
    %377 = vmatprep.subr.mxu0 0.0
    %378 = vmatpush1.msra.mxu0 %v343
    %379 = vmatprep.subr.mxu0 0.0
    %380 = vmatpush1.msra.mxu0 %v344
    %381 = vmatprep.subr.mxu0 0.0
    %382 = vmatpush1.msra.mxu0 %v345
    %383 = vmatprep.subr.mxu0 0.0
    %384 = vmatpush1.msra.mxu0 %v346
    %385 = vmatprep.subr.mxu0 0.0
    %386 = vmatpush1.msra.mxu0 %v347
    %387 = vmatprep.subr.mxu0 0.0
    %388 = vmatpush1.msra.mxu0 0.0
    %389 = vmatprep.subr.mxu0 0.0
    %390 = vmatpush1.msra.mxu0 0.0
    %391 = vmatprep.subr.mxu0 0.0
    %392 = vmatpush1.msra.mxu0 0.0
    %393 = vmatprep.subr.mxu0 0.0
    %394 = vmatpush1.msra.mxu0 0.0
    %395 = vmatprep.subr.mxu0 0.0
    %396 = vmatpush1.msra.mxu0 0.0
    %397 = vmatprep.subr.mxu0 0.0
    %398 = vmatpush1.msra.mxu0 0.0
    %399 = vmatprep.subr.mxu0 0.0
    %400 = vmatpush1.msra.mxu0 0.0
    %401 = vmatprep.subr.mxu0 0.0
    %402 = vmatpush1.msra.mxu0 0.0
    %403 = vmatprep.subr.mxu0 0.0
    %404 = vmatpush1.msra.mxu0 0.0
    %405 = vmatprep.subr.mxu0 0.0
    %406 = vmatpush1.msra.mxu0 0.0
    %407 = vmatprep.subr.mxu0 0.0
    %408 = vmatpush1.msra.mxu0 0.0
    %409 = vmatprep.subr.mxu0 0.0
    %410 = vmatpush1.msra.mxu0 0.0
    %411 = vmatprep.subr.mxu0 0.0
    %412 = vmatpush1.msra.mxu0 0.0
    %413 = vmatprep.subr.mxu0 0.0
    %414 = vmatpush1.msra.mxu0 0.0
    %415 = vmatprep.subr.mxu0 0.0
    %416 = vmatpush1.msra.mxu0 0.0
    %417 = vmatprep.subr.mxu0 0.0
    %418 = vmatpush1.msra.mxu0 0.0
    %419 = vmatprep.mubr.f32.mxu0 0.0
    %420 = vmatmul.mubr.f32.gmra.mrb[0].mxu0 %v348
    %v421 = vpop.f32.mrb[0].mxu0
    %v422 = vadd.f32 %v353, %v421
    %v423 = vpop.f32.mrb[0].mxu0
    %424 = vdwg.mxu0
    %vm425 = vcmask 9216
    %v426 = vsel %vm425, %v422, -inf
    %v427 = vrot.slane %v426, 4
    %v428 = vmax.f32 %v426, %v427
    %v429 = vrot.slane %v428, 2
    %v430 = vmax.f32 %v428, %v429
    %v431 = vrot.slane %v430, 1
    %v432 = vmax.f32 %v430, %v431
    %v433 = vsub.f32 %v422, %v432
    %v434 = vmul.f32 %v433, 1.442695
    %v435 = vpow.pop %v434
    %v436 = vsel %vm425, %v435, 0.0
    %v437 = vrot.slane %v436, 4
    %v438 = vadd.f32 %v436, %v437
    %v439 = vrot.slane %v438, 2
    %v440 = vadd.f32 %v438, %v439
    %v441 = vrot.slane %v440, 1
    %v442 = vadd.f32 %v440, %v441
    %v443 = vrcp.pop %v442
    %v444 = vmul.f32 %v435, %v443
    %445 = vst.msk [vmem:[#allocation2] sm:$0x3] %vm425, %v444
    // Predicated region
    $region22: #{tpu_custom_call.1} parent=1 // pred_check
      _
    $region23: #{tpu_custom_call.1} parent=1 // pred_check_branch
      %447 = sbr.rel (0) target = $region25
    $region24: #{tpu_custom_call.1} parent=1 // pred_region
      %s449 = ssub.s32 32, 32
      %450 = vsyncadd [#allocation3], %s449
      %s452 = sshll.u32 [#allocation2], 4
      %s453 = int_to_ptr.vmem [resolvable:$true] %s452
      %455 = dma.vmem_to_hbm [thread:$0]  %s453, 32, %s5, [#allocation3]
    $region25: #{tpu_custom_call.1} parent=1 // pred_fallthru
      _
    // Predicated region
    $region26: #{tpu_custom_call.1} parent=1 // pred_check
      _
    $region27: #{tpu_custom_call.1} parent=1 // pred_check_branch
      %457 = sbr.rel (0) target = $region29
    $region28: #{tpu_custom_call.1} parent=1 // pred_region
      %458 = dma.done [#allocation3], 32
    $region29: #{tpu_custom_call.1} parent=1 // pred_fallthru
      _
    %459 = vsyncpa [#allocation3], 1

</llo_original>
